<compile_context>
chip_gen: v6e
topology: v6e:2x2x1
jax: 0.10.0
libtpu: 0.0.40
codegen_flags: <defaults>
</compile_context>

<pallas_src>
import jax
import jax.numpy as jnp
import numpy as np
from jax.experimental import pallas as pl
from jax.experimental.pallas import tpu as pltpu


def _ceil_to(x, m):
    return ((x + m - 1) // m) * m


# ----------------------------------------------------------------------------
# sincos positional embedding (deterministic, matches MAE's get_2d_sincos_pos_embed)
# ----------------------------------------------------------------------------
def _get_1d_sincos_pos_embed_from_grid(embed_dim, pos):
    assert embed_dim % 2 == 0
    omega = np.arange(embed_dim // 2, dtype=np.float64)
    omega /= embed_dim / 2.0
    omega = 1.0 / 10000**omega                      # (D/2,)
    pos = pos.reshape(-1)                           # (M,)
    out = np.einsum("m,d->md", pos, omega)          # (M, D/2)
    return np.concatenate([np.sin(out), np.cos(out)], axis=1)  # (M, D)


def get_2d_sincos_pos_embed(embed_dim, grid_size, cls_token=False):
    grid_h = np.arange(grid_size, dtype=np.float64)
    grid_w = np.arange(grid_size, dtype=np.float64)
    grid = np.meshgrid(grid_w, grid_h)              # w goes first
    grid = np.stack(grid, axis=0)
    grid = grid.reshape([2, 1, grid_size, grid_size])
    emb_h = _get_1d_sincos_pos_embed_from_grid(embed_dim // 2, grid[0])
    emb_w = _get_1d_sincos_pos_embed_from_grid(embed_dim // 2, grid[1])
    pos_embed = np.concatenate([emb_h, emb_w], axis=1)  # (N, D)
    if cls_token:
        pos_embed = np.concatenate([np.zeros([1, embed_dim]), pos_embed], axis=0)
    return pos_embed


# ----------------------------------------------------------------------------
# Pallas kernel: (TM, Kp)bf16 @ (Kp, Dp)bf16 on the MXU + fused f32 (pos+bias) add
# ----------------------------------------------------------------------------
def _patch_embed_kernel(patches_ref, w_ref, pos_ref, out_ref):
    # patches_ref: (TM, Kp) bf16   w_ref: (Kp, Dp) bf16   pos_ref: (TM, Dp) f32
    proj = jnp.dot(patches_ref[...], w_ref[...],
                   preferred_element_type=jnp.float32)     # MXU, f32 accumulate
    out_ref[...] = proj + pos_ref[...]                      # VPU, f32 out


def _pick_tile_m(N, Kp, Dp, budget_bytes=24 * 1024 * 1024):
    """Largest 8-aligned N-tile whose double-buffered footprint fits the budget."""
    def footprint(tm):
        return (2 * tm * Kp * 2      # patches  (bf16, 2 pipeline buffers)
                + 2 * Kp * Dp * 2    # weight   (bf16, worst-case 2 buffers)
                + 2 * tm * Dp * 4    # pos+bias (f32,  2 buffers)
                + 2 * tm * Dp * 4)   # output   (f32,  2 buffers)
    tm = min(_ceil_to(N, 8), 1024)
    while tm > 8 and footprint(tm) > budget_bytes:
        tm = _ceil_to(max(tm // 2, 8), 8)
    return tm, footprint(tm)


def base_feature_extractor_forward(x_nchw, proj_weight, proj_bias, pos_embed,
                                   patch_size):
    """x_nchw: (B, C, H, W) float32.  Returns (B, num_patches, embed_dim) f32."""
    B, C, H, W = x_nchw.shape
    p = patch_size
    gh, gw = H // p, W // p
    N = gh * gw
    D = proj_weight.shape[0]
    K = C * p * p

    # TODO(synk): fuse the unfold into the kernel (BlockSpec over the raw NCHW
    # image) to avoid materializing the patch matrix in HBM; the required
    # (C, p, gw, p) -> (gw, C*p*p) on-chip transpose is XLU-heavy, so the
    # wrapper-side bf16 unfold (fused by XLA into one transpose) is kept.
    patches = x_nchw.astype(jnp.bfloat16).reshape(B, C, gh, p, gw, p)
    patches = patches.transpose(0, 2, 4, 1, 3, 5).reshape(B, N, K)

    # Conv weight (D, C, p, p) -> matmul weight (K, D), bf16 MXU inputs.
    w_mat = proj_weight.reshape(D, K).T.astype(jnp.bfloat16)        # (K, D)
    # Fold the bias into the (cls-dropped) positional embedding -> one f32 add.
    pos_plus_bias = (pos_embed[0, 1:, :]
                     + proj_bias[None, :]).astype(jnp.float32)       # (N, D)

    # MXU / lane alignment: K, D -> multiples of 128; tile N with TM (mult. of 8).
    Kp = _ceil_to(K, 128)
    Dp = _ceil_to(D, 128)
    TM, footprint = _pick_tile_m(N, Kp, Dp)
    Np = _ceil_to(N, TM)

    patches = jnp.pad(patches, ((0, 0), (0, Np - N), (0, Kp - K)))
    w_pad = jnp.pad(w_mat, ((0, Kp - K), (0, Dp - D)))
    pos_pad = jnp.pad(pos_plus_bias, ((0, Np - N), (0, Dp - D)))

    grid = (B, Np // TM)

    vmem_limit = int(min(64 * 1024 * 1024,
                         max(32 * 1024 * 1024, 2 * footprint)))

    cost = pl.CostEstimate(
        flops=2 * B * Np * Kp * Dp,
        transcendentals=0,
        bytes_accessed=int(patches.size * 2 + w_pad.size * 2
                           + pos_pad.size * 4 + B * Np * Dp * 4))

    out = pl.pallas_call(
        _patch_embed_kernel,
        out_shape=jax.ShapeDtypeStruct((B, Np, Dp), jnp.float32),
        grid_spec=pltpu.PrefetchScalarGridSpec(
            num_scalar_prefetch=0,
            grid=grid,
            in_specs=[
                # leading batch dim squeezed -> kernel sees 2-D tiles
                pl.BlockSpec((None, TM, Kp), lambda b, n: (b, n, 0)),
                pl.BlockSpec((Kp, Dp), lambda b, n: (0, 0)),   # grid-invariant
                pl.BlockSpec((TM, Dp), lambda b, n: (n, 0)),
            ],
            out_specs=pl.BlockSpec((None, TM, Dp), lambda b, n: (b, n, 0)),
        ),
        compiler_params=pltpu.CompilerParams(
            dimension_semantics=("parallel", "parallel"),
            vmem_limit_bytes=vmem_limit),
        cost_estimate=cost,
    )(patches, w_pad, pos_pad)

    # Slice the lane/row padding back off.
    return out[:, :N, :D]


# ----------------------------------------------------------------------------
# Deterministic parameter construction (mirrors BaseFeatureExtractor.__init__)
# ----------------------------------------------------------------------------
def make_params(embed_dim, img_size, patch_size, in_chans=3, seed=0):
    key = jax.random.PRNGKey(seed)
    gh = img_size // patch_size
    K = in_chans * patch_size * patch_size

    # xavier_uniform on proj weight viewed as (embed_dim, K)
    limit = float(np.sqrt(6.0 / (embed_dim + K)))
    k_w, _ = jax.random.split(key)
    proj_weight = jax.random.uniform(
        k_w, (embed_dim, in_chans, patch_size, patch_size),
        minval=-limit, maxval=limit, dtype=jnp.float32)
    proj_bias = jnp.zeros((embed_dim,), jnp.float32)

    pos = get_2d_sincos_pos_embed(embed_dim, gh, cls_token=True)    # (N+1, D)
    pos_embed = jnp.asarray(pos, dtype=jnp.float32)[None, :, :]     # (1, N+1, D)
    # cls_token (std=0.02 normal) is a module parameter but unused in forward.
    return proj_weight, proj_bias, pos_embed


# ----------------------------------------------------------------------------
# Pure-JAX reference for correctness check (same bf16 MXU inputs, f32 accumulate)
# ----------------------------------------------------------------------------
def reference_forward(x_nchw, proj_weight, proj_bias, pos_embed, patch_size):
    xb = x_nchw.astype(jnp.bfloat16)
    wb = proj_weight.astype(jnp.bfloat16)
    y = jax.lax.conv_general_dilated(
        xb, wb,
        window_strides=(patch_size, patch_size), padding="VALID",
        dimension_numbers=("NCHW", "OIHW", "NCHW"),
        preferred_element_type=jnp.float32)
    y = y + proj_bias[None, :, None, None]
    B, D, gh, gw = y.shape
    y = y.reshape(B, D, gh * gw).transpose(0, 2, 1)                 # (B, N, D)
    return y + pos_embed[:, 1:, :]


if __name__ == "__main__":
    # Small shapes consistent with the module: img_size=16, patch_size=4,
    # in_chans=3, embed_dim=32, batch=2  ->  num_patches = 16.
    batch, in_chans, img_size, patch_size, embed_dim = 2, 3, 16, 4, 32

    proj_weight, proj_bias, pos_embed = make_params(
        embed_dim, img_size, patch_size, in_chans, seed=0)

    key = jax.random.PRNGKey(0)
    x = jax.random.normal(key, (batch, in_chans, img_size, img_size),
                          dtype=jnp.float32)

    out = base_feature_extractor_forward(x, proj_weight, proj_bias, pos_embed,
                                         patch_size)
    out = jax.block_until_ready(out)

    ref = reference_forward(x, proj_weight, proj_bias, pos_embed, patch_size)
    np.testing.assert_allclose(np.asarray(out), np.asarray(ref),
                               rtol=1e-2, atol=1e-2)
    print("KERNEL_OK")
</pallas_src>

<mosaic_0001>
module attributes {stable_mosaic.version = 11 : i64} {
  func.func @_patch_embed_kernel(%arg0: i32, %arg1: i32, %arg2: memref<1x16x128xbf16, #tpu.memory_space<vmem>>, %arg3: memref<128x128xbf16, #tpu.memory_space<vmem>>, %arg4: memref<16x128xf32, #tpu.memory_space<vmem>>, %arg5: memref<1x16x128xf32, #tpu.memory_space<vmem>>) attributes {dimension_semantics = [#tpu.dimension_semantics<parallel>, #tpu.dimension_semantics<parallel>], iteration_bounds = array<i64: 2, 1>, scalar_prefetch = 0 : i64, scratch_operands = 0 : i64, tpu.core_type = #tpu.core_type<tc>, window_params = [{transform_indices = @transform_0, window_bounds = array<i64: 1, 16, 128>}, {pipeline_mode = #tpu.pipeline_mode<synchronous>, transform_indices = @transform_1, window_bounds = array<i64: 128, 128>}, {transform_indices = @transform_2, window_bounds = array<i64: 16, 128>}, {transform_indices = @transform_3, window_bounds = array<i64: 1, 16, 128>}]} {
    %c0 = arith.constant 0 : index
    %c0_0 = arith.constant 0 : index
    %c0_1 = arith.constant 0 : index
    %0 = vector.load %arg2[%c0, %c0_0, %c0_1] : memref<1x16x128xbf16, #tpu.memory_space<vmem>>, vector<1x16x128xbf16>
    %1 = vector.shape_cast %0 : vector<1x16x128xbf16> to vector<16x128xbf16>
    %c0_2 = arith.constant 0 : index
    %c0_3 = arith.constant 0 : index
    %2 = vector.load %arg3[%c0_2, %c0_3] : memref<128x128xbf16, #tpu.memory_space<vmem>>, vector<128x128xbf16>
    %cst = arith.constant dense<0.000000e+00> : vector<16x128xf32>
    %3 = tpu.matmul %1, %2, %cst {dimension_numbers = #tpu.dot_dimension_numbers<[1], [0], [0], [1], [0, 0, 1, 1], [], []>} : vector<16x128xbf16>, vector<128x128xbf16>, vector<16x128xf32> -> vector<16x128xf32>
    %c0_4 = arith.constant 0 : index
    %c0_5 = arith.constant 0 : index
    %4 = vector.load %arg4[%c0_4, %c0_5] : memref<16x128xf32, #tpu.memory_space<vmem>>, vector<16x128xf32>
    %5 = arith.addf %3, %4 : vector<16x128xf32>
    %c0_6 = arith.constant 0 : index
    %c0_7 = arith.constant 0 : index
    %c0_8 = arith.constant 0 : index
    %6 = vector.load %arg5[%c0_6, %c0_7, %c0_8] : memref<1x16x128xf32, #tpu.memory_space<vmem>>, vector<1x16x128xf32>
    %7 = vector.shape_cast %6 : vector<1x16x128xf32> to vector<16x128xf32>
    %8 = vector.shape_cast %5 : vector<16x128xf32> to vector<1x16x128xf32>
    tpu.vector_store %arg5[%c0_6, %c0_7, %c0_8], %8 {strides = array<i32>} : memref<1x16x128xf32, #tpu.memory_space<vmem>>, vector<1x16x128xf32>,
    return
  }
  func.func @transform_0(%arg0: i32, %arg1: i32) -> (i32, i32, i32) {
    %c0_i32 = arith.constant 0 : i32
    %c0_i32_0 = arith.constant 0 : i32
    return %arg0, %arg1, %c0_i32 : i32, i32, i32
  }
  func.func @transform_1(%arg0: i32, %arg1: i32) -> (i32, i32) {
    %c0_i32 = arith.constant 0 : i32
    %c0_i32_0 = arith.constant 0 : i32
    %c0_i32_1 = arith.constant 0 : i32
    return %c0_i32, %c0_i32_0 : i32, i32
  }
  func.func @transform_2(%arg0: i32, %arg1: i32) -> (i32, i32) {
    %c0_i32 = arith.constant 0 : i32
    %c0_i32_0 = arith.constant 0 : i32
    return %arg1, %c0_i32 : i32, i32
  }
  func.func @transform_3(%arg0: i32, %arg1: i32) -> (i32, i32, i32) {
    %c0_i32 = arith.constant 0 : i32
    %c0_i32_0 = arith.constant 0 : i32
    return %arg0, %arg1, %c0_i32 : i32, i32, i32
  }
}

</mosaic_0001>

<llo_original>
// kernel: tpu_custom_call.1
$region0: #{tpu_custom_call.1}
  #allocation0 [shape = 'u32[]', space=smem, size = 0x4, offset = 0x4, fixed_abs, tag = 'smem constant byte address 0x4 - core index']
  #allocation1 [shape = 'u32[144,128]{1,0:T(1,128)}', space=vmem, size = 0x12000, scoped, tag = 'internal scratch']
  %s0 = inlined_call_operand.hbm [shape: bf16[2,16,128], index: 0, kind: input, shape index: {}]
  %s1 = inlined_call_operand.hbm [shape: bf16[128,128], index: 1, kind: input, shape index: {}]
  %s2 = inlined_call_operand.hbm [shape: f32[16,128], index: 2, kind: input, shape index: {}]
  %s3 = inlined_call_operand.hbm [shape: f32[2,16,128], index: 3, kind: output, shape index: {}]
  %s4 = sld [smem:[#allocation0]]
  $region57: #{tpu_custom_call.1} parent=0
    _
  %s6 = ssub.s32 1, %s4
  %s7 = scalar_select 0, %s6, %s4
  $region1: #{tpu_custom_call.1} parent=0
    #allocation2 [shape = 'u8[8192]{0}', space=vmem, size = 0x2000, scoped, tag = 'input window, operand 0']
    #allocation3 [shape = 's32[2]{0}', space=sflag, size = 0x8, scoped, tag = 'scoped memory for tpu_custom_call.1']
    #allocation4 [shape = 's32[2]{0}', space=sflag, size = 0x8, scoped, tag = 'scoped memory for tpu_custom_call.1']
    #allocation5 [shape = 'u8[32768]{0}', space=vmem, size = 0x8000, scoped, tag = 'input window, operand 1, single buffered']
    #allocation6 [shape = 's32[1]{0}', space=sflag, size = 0x4, scoped, tag = 'scoped memory for tpu_custom_call.1']
    #allocation7 [shape = 'u8[8192]{0}', space=vmem, size = 0x2000, scoped, tag = 'input window, operand 2, single buffered']
    #allocation8 [shape = 'u8[16384]{0}', space=vmem, size = 0x4000, scoped, tag = 'output window, operand 0']
    %8 = vsyncpa [#allocation3], 0
    %s9 = scalar_lea.sflag [#allocation3], 1
    %10 = vsyncpa %s9, 0
    %11 = vsyncpa [#allocation6], 0
    %12 = vsyncpa [#allocation4], 0
    %s13 = scalar_lea.sflag [#allocation4], 1
    %14 = vsyncpa %s13, 0
    loop: start=0, step=1, limit=4
    $region2: #{tpu_custom_call.1} parent=1 // loop_pre_header
      _
    $region3: #{tpu_custom_call.1} parent=1 // loop_header
      %s16 = sphi 0, %s20
      %p17 = scmp.ge.s32.totalorder %s16, 4
      %s23 = sphi 0, %s35
      %s24 = sphi 0, %s31
      %s25 = sphi 0, %s23
      %s26 = sphi 0, %s24
      %s27 = sphi 0, %s25
      %s28 = sphi 0, %s26
      %s40 = sphi 0, %s42
      %s43 = sphi 0, %s40
      %s44 = sphi 0, %s43
      %s60 = sphi 0, %s44
      %s64 = sphi 0, %s64
      %s66 = sphi 0, %s64
      %s67 = sphi 0, %s66
      %s81 = sphi 0, %s67
      %s87 = sphi 0, %s89
      %s90 = sphi 0, %s87
      %s91 = sphi 0, %s90
      %s107 = sphi 0, %s91
      %s115 = sphi 0, %s117
      %s118 = sphi 0, %s115
      %s119 = sphi 0, %s118
      %s135 = sphi 0, %s119
    $region4: #{tpu_custom_call.1} parent=1 // loop_header_branch
      %19 = sbr.rel (%p17) target = $region8
    $region5: #{tpu_custom_call.1} parent=1 // loop_body
      %s21 = ssub.s32 %s16, 1
      %s22 = ssub.s32 %s16, 2
      %s29 = sadd.s32 1, %s24
      %p30 = scmp.ge.s32.totalorder %s29, 1
      %s31 = scalar_select %p30, 0, %s29
      %s32 = sadd.s32 1, %s23
      %s33 = scalar_select %p30, %s32, %s23
      %p34 = scmp.ge.s32.totalorder %s33, 2
      %s35 = scalar_select %p34, 0, %s33
      %s36 = ssub.s32 %s23, %s35
      %s37 = ssub.s32 %s24, %s31
      %s38 = sor.u32 %s36, %s37
      %p39 = scmp.eq.s32.totalorder %s38, 0
      %s41 = sadd.s32 %s40, 1
      %s42 = scalar_select %p39, %s40, %s41
      %p45 = pneg %p39
      %p46 = scmp.eq.s32.totalorder %s16, 1
      %p47 = por %p45, %p46
      %p48 = scmp.ne.s32.totalorder %s40, %s43
      %p49 = scmp.eq.s32.totalorder %s16, 0
      %p50 = por %p48, %p49
      %p51 = scmp.ne.s32.totalorder %s40, %s43
      %p52 = scmp.eq.s32.totalorder %s21, 1
      %p53 = por %p51, %p52
      %p54 = scmp.ne.s32.totalorder %s43, %s44
      %p55 = scmp.eq.s32.totalorder %s21, 0
      %p56 = por %p54, %p55
      %p57 = scmp.ne.s32.totalorder %s43, %s44
      %p58 = scmp.eq.s32.totalorder %s22, 1
      %p59 = por %p57, %p58
      %p61 = scmp.ne.s32.totalorder %s44, %s60
      %p62 = scmp.eq.s32.totalorder %s22, 0
      %p63 = por %p61, %p62
      %s65 = sadd.s32 %s64, 1
      %p68 = scmp.eq.s32.totalorder %s16, 1
      %p69 = scmp.ne.s32.totalorder %s64, %s66
      %p70 = scmp.eq.s32.totalorder %s16, 0
      %p71 = por %p69, %p70
      %p72 = scmp.ne.s32.totalorder %s64, %s66
      %p73 = scmp.eq.s32.totalorder %s21, 1
      %p74 = por %p72, %p73
      %p75 = scmp.ne.s32.totalorder %s66, %s67
      %p76 = scmp.eq.s32.totalorder %s21, 0
      %p77 = por %p75, %p76
      %p78 = scmp.ne.s32.totalorder %s66, %s67
      %p79 = scmp.eq.s32.totalorder %s22, 1
      %p80 = por %p78, %p79
      %p82 = scmp.ne.s32.totalorder %s67, %s81
      %p83 = scmp.eq.s32.totalorder %s22, 0
      %p84 = por %p82, %p83
      %s85 = ssub.s32 %s24, %s31
      %p86 = scmp.eq.s32.totalorder %s85, 0
      %s88 = sadd.s32 %s87, 1
      %s89 = scalar_select %p86, %s87, %s88
      %p92 = pneg %p86
      %p93 = scmp.eq.s32.totalorder %s16, 1
      %p94 = por %p92, %p93
      %p95 = scmp.ne.s32.totalorder %s87, %s90
      %p96 = scmp.eq.s32.totalorder %s16, 0
      %p97 = por %p95, %p96
      %p98 = scmp.ne.s32.totalorder %s87, %s90
      %p99 = scmp.eq.s32.totalorder %s21, 1
      %p100 = por %p98, %p99
      %p101 = scmp.ne.s32.totalorder %s90, %s91
      %p102 = scmp.eq.s32.totalorder %s21, 0
      %p103 = por %p101, %p102
      %p104 = scmp.ne.s32.totalorder %s90, %s91
      %p105 = scmp.eq.s32.totalorder %s22, 1
      %p106 = por %p104, %p105
      %p108 = scmp.ne.s32.totalorder %s91, %s107
      %p109 = scmp.eq.s32.totalorder %s22, 0
      %p110 = por %p108, %p109
      %s111 = ssub.s32 %s23, %s35
      %s112 = ssub.s32 %s24, %s31
      %s113 = sor.u32 %s111, %s112
      %p114 = scmp.eq.s32.totalorder %s113, 0
      %s116 = sadd.s32 %s115, 1
      %s117 = scalar_select %p114, %s115, %s116
      %p120 = pneg %p114
      %p121 = scmp.eq.s32.totalorder %s16, 1
      %p122 = por %p120, %p121
      %p123 = scmp.ne.s32.totalorder %s115, %s118
      %p124 = scmp.eq.s32.totalorder %s16, 0
      %p125 = por %p123, %p124
      %p126 = scmp.ne.s32.totalorder %s115, %s118
      %p127 = scmp.eq.s32.totalorder %s21, 1
      %p128 = por %p126, %p127
      %p129 = scmp.ne.s32.totalorder %s118, %s119
      %p130 = scmp.eq.s32.totalorder %s21, 0
      %p131 = por %p129, %p130
      %p132 = scmp.ne.s32.totalorder %s118, %s119
      %p133 = scmp.eq.s32.totalorder %s22, 1
      %p134 = por %p132, %p133
      %p136 = scmp.ne.s32.totalorder %s119, %s135
      %p137 = scmp.eq.s32.totalorder %s22, 0
      %p138 = por %p136, %p137
      %p139 = scmp.le.s32.totalorder 1, %s16
      %p140 = scmp.lt.s32.totalorder %s16, 3
      %p141 = pnand %p139, %p140
      %p142 = pneg %p141
      // Predicated region
      $region9: #{tpu_custom_call.1} parent=5 // pred_check
        _
      $region10: #{tpu_custom_call.1} parent=5 // pred_check_branch
        %144 = sbr.rel (%p141) target = $region12
      $region11: #{tpu_custom_call.1} parent=5 // pred_region
        %s145 = ssub.s32 %s16, 1
        // Predicated region
        $region13: #{tpu_custom_call.1} parent=11 // pred_check
          %p146 = pneg %p77
        $region14: #{tpu_custom_call.1} parent=11 // pred_check_branch
          %148 = sbr.rel (%p146) target = $region16
        $region15: #{tpu_custom_call.1} parent=11 // pred_region
          %s150 = ssub.s32 1024, 1024
          %151 = vsyncadd [#allocation6], %s150
          %s152 = sshll.u32 [#allocation5], 4
          %s153 = int_to_ptr.vmem [resolvable:$true] %s152
          %158 = dma.hbm_to_vmem [thread:$0]  %s1, 1024, %s153, [#allocation6], 64, 64, 4
        $region16: #{tpu_custom_call.1} parent=11 // pred_fallthru
          _
        // Predicated region
        $region17: #{tpu_custom_call.1} parent=11 // pred_check
          %p159 = pneg %p103
        $region18: #{tpu_custom_call.1} parent=11 // pred_check_branch
          %161 = sbr.rel (%p159) target = $region20
        $region19: #{tpu_custom_call.1} parent=11 // pred_region
          %s162 = smul.u32 2, %s26
          %s164 = ssub.s32 256, 256
          %165 = vsyncadd [#allocation6], %s164
          %s166 = smul.addr %s162, 128
          %s167 = scalar_lea.hbm %s2, %s166
          %s168 = sshll.u32 [#allocation7], 4
          %s169 = int_to_ptr.vmem [resolvable:$true] %s168
          %174 = dma.hbm_to_vmem [thread:$0]  %s167, 256, %s169, [#allocation6], 128, 128, 8
        $region20: #{tpu_custom_call.1} parent=11 // pred_fallthru
          _
      $region12: #{tpu_custom_call.1} parent=5 // pred_fallthru
        _
      %p175 = scmp.lt.s32.totalorder %s16, 2
      // Predicated region
      $region21: #{tpu_custom_call.1} parent=5 // pred_check
        %p176 = pneg %p175
      $region22: #{tpu_custom_call.1} parent=5 // pred_check_branch
        %178 = sbr.rel (%p176) target = $region24
      $region23: #{tpu_custom_call.1} parent=5 // pred_region
        // Predicated region
        $region25: #{tpu_custom_call.1} parent=23 // pred_check
          %p179 = pneg %p50
        $region26: #{tpu_custom_call.1} parent=23 // pred_check_branch
          %181 = sbr.rel (%p179) target = $region28
        $region27: #{tpu_custom_call.1} parent=23 // pred_region
          %s182 = sand.u32 %s40, 1
          %s183 = scalar_lea.sflag [#allocation3], %s182
          %s184 = sand.u32 %s40, 1
          %s185 = smul.addr %s184, 8
          %s186 = scalar_lea.vmem [#allocation2], %s185
          %s187 = smul.u32 2, %s24
          %s189 = ssub.s32 128, 128
          %190 = vsyncadd %s183, %s189
          %s191 = smul.addr %s23, 2
          %s192 = sadd.s32 %s187, %s191
          %s193 = smul.addr %s192, 64
          %s194 = scalar_lea.hbm %s0, %s193
          %s195 = sshll.u32 %s186, 4
          %s196 = int_to_ptr.vmem [resolvable:$true] %s195
          %201 = dma.hbm_to_vmem [thread:$0]  %s194, 128, %s196, %s183, 64, 64, 4
        $region28: #{tpu_custom_call.1} parent=23 // pred_fallthru
          _
      $region24: #{tpu_custom_call.1} parent=5 // pred_fallthru
        _
      %p202 = scmp.le.s32.totalorder 1, %s16
      %p203 = scmp.lt.s32.totalorder %s16, 3
      %p204 = pnand %p202, %p203
      %p205 = pneg %p204
      // Predicated region
      $region29: #{tpu_custom_call.1} parent=5 // pred_check
        _
      $region30: #{tpu_custom_call.1} parent=5 // pred_check_branch
        %207 = sbr.rel (%p204) target = $region32
      $region31: #{tpu_custom_call.1} parent=5 // pred_region
        %s208 = ssub.s32 %s16, 1
        %s209 = sand.u32 %s43, 1
        %s210 = scalar_lea.sflag [#allocation3], %s209
        %s211 = sand.u32 %s43, 1
        %s212 = smul.addr %s211, 8
        %s213 = scalar_lea.vmem [#allocation2], %s212
        // Predicated region
        $region33: #{tpu_custom_call.1} parent=31 // pred_check
          %p214 = pneg %p56
        $region34: #{tpu_custom_call.1} parent=31 // pred_check_branch
          %216 = sbr.rel (%p214) target = $region36
        $region35: #{tpu_custom_call.1} parent=31 // pred_region
          %217 = dma.done %s210, 128
        $region36: #{tpu_custom_call.1} parent=31 // pred_fallthru
          _
        // Predicated region
        $region37: #{tpu_custom_call.1} parent=31 // pred_check
          %p218 = pneg %p77
        $region38: #{tpu_custom_call.1} parent=31 // pred_check_branch
          %220 = sbr.rel (%p218) target = $region40
        $region39: #{tpu_custom_call.1} parent=31 // pred_region
          %221 = dma.done [#allocation6], 1024
        $region40: #{tpu_custom_call.1} parent=31 // pred_fallthru
          _
        // Predicated region
        $region41: #{tpu_custom_call.1} parent=31 // pred_check
          %p222 = pneg %p103
        $region42: #{tpu_custom_call.1} parent=31 // pred_check_branch
          %224 = sbr.rel (%p222) target = $region44
        $region43: #{tpu_custom_call.1} parent=31 // pred_region
          %225 = dma.done [#allocation6], 256
        $region44: #{tpu_custom_call.1} parent=31 // pred_fallthru
          _
        %s226 = sand.u32 %s43, 1
        %s227 = scalar_lea.sflag [#allocation3], %s226
        %s228 = sand.u32 %s43, 1
        %s229 = smul.addr %s228, 8
        %s230 = scalar_lea.vmem [#allocation2], %s229
        %p231 = pneg %p56
        %p232 = pneg %p53
        %p233 = pneg %p77
        %p234 = pneg %p74
        %p235 = pneg %p103
        %p236 = pneg %p100
        %p237 = pneg %p131
        %p238 = pneg %p128
        %s239 = sand.u32 %s118, 1
        %s240 = scalar_lea.sflag [#allocation4], %s239
        %s241 = sand.u32 %s118, 1
        %s242 = smul.addr %s241, 16
        %s243 = scalar_lea.vmem [#allocation8], %s242
        %s244 = smul.u32 2, %s26
        %s245 = smul.u32 2, %s26
        %s246 = smul.u32 2, %s26
        %v248 = vld [vmem:[%s213] sm:$0xf]
        %v249 = vld [vmem:[%s213 + $0x4] sm:$0xf]
        %v250 = vld [vmem:[#allocation5] sm:$0xf]
        %v251 = vld [vmem:[#allocation5 + $0x4] sm:$0xf]
        %v252 = vld [vmem:[#allocation5 + $0x8] sm:$0xf]
        %v253 = vld [vmem:[#allocation5 + $0xc] sm:$0xf]
        %v254 = vld [vmem:[#allocation5 + $0x10] sm:$0xf]
        %v255 = vld [vmem:[#allocation5 + $0x14] sm:$0xf]
        %v256 = vld [vmem:[#allocation5 + $0x18] sm:$0xf]
        %v257 = vld [vmem:[#allocation5 + $0x1c] sm:$0xf]
        %v258 = vld [vmem:[#allocation5 + $0x20] sm:$0xf]
        %v259 = vld [vmem:[#allocation5 + $0x24] sm:$0xf]
        %v260 = vld [vmem:[#allocation5 + $0x28] sm:$0xf]
        %v261 = vld [vmem:[#allocation5 + $0x2c] sm:$0xf]
        %v262 = vld [vmem:[#allocation5 + $0x30] sm:$0xf]
        %v263 = vld [vmem:[#allocation5 + $0x34] sm:$0xf]
        %v264 = vld [vmem:[#allocation5 + $0x38] sm:$0xf]
        %v265 = vld [vmem:[#allocation5 + $0x3c] sm:$0xf]
        %v266 = vld [vmem:[#allocation7] sm:$0xff]
        %v267 = vld [vmem:[#allocation7 + $0x8] sm:$0xff]
        %v270 = vunpack.c.l.b16 %v248
        %v271 = vunpack.c.l.b16 %v249
        %v272 = vpack.c.b16 %v271, %v270
        %v290 = vunpack.c.l.b16 %v250
        %v291 = vunpack.c.l.b16 %v251
        %v292 = vunpack.c.l.b16 %v252
        %v293 = vunpack.c.l.b16 %v253
        %v294 = vunpack.c.l.b16 %v254
        %v295 = vunpack.c.l.b16 %v255
        %v296 = vunpack.c.l.b16 %v256
        %v297 = vunpack.c.l.b16 %v257
        %v298 = vunpack.c.l.b16 %v258
        %v299 = vunpack.c.l.b16 %v259
        %v300 = vunpack.c.l.b16 %v260
        %v301 = vunpack.c.l.b16 %v261
        %v302 = vunpack.c.l.b16 %v262
        %v303 = vunpack.c.l.b16 %v263
        %v304 = vunpack.c.l.b16 %v264
        %v305 = vunpack.c.l.b16 %v265
        %v306 = vpack.c.b16 %v291, %v290
        %v307 = vpack.c.b16 %v293, %v292
        %v308 = vpack.c.b16 %v295, %v294
        %v309 = vpack.c.b16 %v297, %v296
        %v310 = vpack.c.b16 %v299, %v298
        %v311 = vpack.c.b16 %v301, %v300
        %v312 = vpack.c.b16 %v303, %v302
        %v313 = vpack.c.b16 %v305, %v304
        %322 = vmatprep.subr.bf16.mxu0 0
        %323 = vmatpush1.bf16.msra.mxu0 %v313
        %324 = vmatprep.subr.bf16.mxu0 0
        %325 = vmatpush1.bf16.msra.mxu0 %v312
        %326 = vmatprep.subr.bf16.mxu0 0
        %327 = vmatpush1.bf16.msra.mxu0 %v311
        %328 = vmatprep.subr.bf16.mxu0 0
        %329 = vmatpush1.bf16.msra.mxu0 %v310
        %330 = vmatprep.subr.bf16.mxu0 0
        %331 = vmatpush1.bf16.msra.mxu0 %v309
        %332 = vmatprep.subr.bf16.mxu0 0
        %333 = vmatpush1.bf16.msra.mxu0 %v308
        %334 = vmatprep.subr.bf16.mxu0 0
        %335 = vmatpush1.bf16.msra.mxu0 %v307
        %336 = vmatprep.subr.bf16.mxu0 0
        %337 = vmatpush1.bf16.msra.mxu0 %v306
        %338 = vmatprep.subr.bf16.mxu0 0
        %339 = vmatpush2.bf16.msra.mxu0 0
        %340 = vmatprep.subr.bf16.mxu0 0
        %341 = vmatpush2.bf16.msra.mxu0 0
        %342 = vmatprep.subr.bf16.mxu0 0
        %343 = vmatpush2.bf16.msra.mxu0 0
        %344 = vmatprep.subr.bf16.mxu0 0
        %345 = vmatpush2.bf16.msra.mxu0 0
        %346 = vmatprep.subr.bf16.mxu0 0
        %347 = vmatpush2.bf16.msra.mxu0 0
        %348 = vmatprep.subr.bf16.mxu0 0
        %349 = vmatpush2.bf16.msra.mxu0 0
        %350 = vmatprep.subr.bf16.mxu0 0
        %351 = vmatpush2.bf16.msra.mxu0 0
        %352 = vmatprep.subr.bf16.mxu0 0
        %353 = vmatpush2.bf16.msra.mxu0 0
        %354 = vmatprep.mubr.bf16.mxu0 0
        %355 = vmatmul.mubr.bf16.gmra.mxu0 %v272
        %v356 = vpop.f32.mrf.mxu0
        %v357 = vadd.f32 %v266, %v356
        %v358 = vpop.f32.mrf.mxu0
        %v359 = vpop.f32.mrf.mxu0
        %v360 = vadd.f32 %v267, %v359
        %v361 = vpop.f32.mrf.mxu0
        %362 = vdwg.mxu0
        %363 = vst [vmem:[%s243] sm:$0xff] %v357
        %364 = vst [vmem:[%s243 + $0x8] sm:$0xff] %v360
        %s365 = sand.u32 %s118, 1
        %s366 = scalar_lea.sflag [#allocation4], %s365
        %s367 = sand.u32 %s118, 1
        %s368 = smul.addr %s367, 16
        %s369 = scalar_lea.vmem [#allocation8], %s368
        // Predicated region
        $region45: #{tpu_custom_call.1} parent=31 // pred_check
          %p370 = pneg %p128
        $region46: #{tpu_custom_call.1} parent=31 // pred_check_branch
          %372 = sbr.rel (%p370) target = $region48
        $region47: #{tpu_custom_call.1} parent=31 // pred_region
          %s373 = smul.u32 2, %s26
          %s375 = ssub.s32 256, 256
          %376 = vsyncadd %s366, %s375
          %s377 = smul.addr %s25, 2
          %s378 = sadd.s32 %s373, %s377
          %s379 = smul.addr %s378, 128
          %s380 = scalar_lea.hbm %s3, %s379
          %s381 = sshll.u32 %s369, 4
          %s382 = int_to_ptr.vmem [resolvable:$true] %s381
          %387 = dma.vmem_to_hbm [thread:$0]  %s382, 256, %s380, %s366, 128, 128, 8
        $region48: #{tpu_custom_call.1} parent=31 // pred_fallthru
          _
      $region32: #{tpu_custom_call.1} parent=5 // pred_fallthru
        _
      %p388 = scmp.le.s32.totalorder 2, %s16
      // Predicated region
      $region49: #{tpu_custom_call.1} parent=5 // pred_check
        %p389 = pneg %p388
      $region50: #{tpu_custom_call.1} parent=5 // pred_check_branch
        %391 = sbr.rel (%p389) target = $region52
      $region51: #{tpu_custom_call.1} parent=5 // pred_region
        %s392 = ssub.s32 %s16, 2
        // Predicated region
        $region53: #{tpu_custom_call.1} parent=51 // pred_check
          %p393 = pneg %p134
        $region54: #{tpu_custom_call.1} parent=51 // pred_check_branch
          %395 = sbr.rel (%p393) target = $region56
        $region55: #{tpu_custom_call.1} parent=51 // pred_region
          %s396 = sand.u32 %s119, 1
          %s397 = scalar_lea.sflag [#allocation4], %s396
          %s398 = sand.u32 %s119, 1
          %s399 = smul.addr %s398, 16
          %s400 = scalar_lea.vmem [#allocation8], %s399
          %401 = dma.done %s397, 256
        $region56: #{tpu_custom_call.1} parent=51 // pred_fallthru
          _
      $region52: #{tpu_custom_call.1} parent=5 // pred_fallthru
        _
    $region6: #{tpu_custom_call.1} parent=1 // loop_footer
      %s20 = sadd.s32 1, %s16
    $region7: #{tpu_custom_call.1} parent=1 // loop_footer_branch
      %15 = sbr.rel target = $region3
    $region8: #{tpu_custom_call.1} parent=1 // loop_exit
      _
    %402 = vsyncpa [#allocation3], 1
    %s403 = scalar_lea.sflag [#allocation3], 1
    %404 = vsyncpa %s403, 1
    %405 = vsyncpa [#allocation6], 1
    %406 = vsyncpa [#allocation4], 1
    %s407 = scalar_lea.sflag [#allocation4], 1
    %408 = vsyncpa %s407, 1

</llo_original>
